<compile_context>
chip_gen: v7x
topology: tpu7x:2x2x1
jax: 0.10.0
libtpu: 0.0.40
codegen_flags: <defaults>
</compile_context>

<pallas_src>
import numpy as np
import jax
import jax.numpy as jnp
from jax import lax
from jax.experimental import pallas as pl
from jax.experimental.pallas import tpu as pltpu


_LANES = 128          # lane-dense output row width (one unmasked vst)
_SMALL_N_MAX = 8192   # up to here: single-block native-layout path (no repack)
_TILE_N = 4096        # boxes per grid step for the large-N lane-dense path


# ----------------------------------------------------------------------------
# Path 1: small/common N -- native (N, C) layout, single block, no scratch.
# ----------------------------------------------------------------------------
def _sizes_small(bboxes: jax.Array) -> jax.Array:
    n, c = bboxes.shape

    def kernel(bb_ref, stats_ref):
        b = bb_ref[...]                              # (N, C) f32
        dx = b[:, 2:3] - b[:, 0:1]                   # (N, 1)
        dy = b[:, 3:4] - b[:, 1:2]
        # sqrt((dx/15)^2 + (dy/15)^2) == sqrt(dx^2 + dy^2) * (1/15)
        # (~1 ulp drift vs per-element division; within test tolerance).
        sizes = jnp.sqrt(dx * dx + dy * dy) * jnp.float32(1.0 / 15.0)

        mn = jnp.min(sizes, keepdims=True)           # (1, 1)
        mx = jnp.max(sizes, keepdims=True)
        mean = jnp.sum(sizes, keepdims=True) * jnp.float32(1.0 / n)

        lane = lax.broadcasted_iota(jnp.int32, (1, _LANES), 1)
        mn_b = jnp.broadcast_to(mn, (1, _LANES))
        mx_b = jnp.broadcast_to(mx, (1, _LANES))
        mean_b = jnp.broadcast_to(mean, (1, _LANES))
        # lane 0 = min, lane 1 = mean, lane 2 = max (lanes >=3 hold mean,
        # sliced off host-side) -- one full-width unmasked store.
        stats_ref[...] = jnp.where(lane == 0, mn_b,
                                   jnp.where(lane == 2, mx_b, mean_b))

    return pl.pallas_call(
        kernel,
        out_shape=jax.ShapeDtypeStruct((1, _LANES), jnp.float32),
        grid=(1,),
        in_specs=[pl.BlockSpec((n, c), lambda i: (0, 0))],
        out_specs=pl.BlockSpec((1, _LANES), lambda i: (0, 0)),
    )(bboxes.astype(jnp.float32))


_sizes_small = jax.jit(_sizes_small)


# ----------------------------------------------------------------------------
# Path 2: large N -- lane-dense (4, n_pad) slab, tiled grid, lane-wise accs.
# ----------------------------------------------------------------------------
def _sizes_tiled(bboxes: jax.Array) -> jax.Array:
    n = bboxes.shape[0]
    n_pad = ((n + _TILE_N - 1) // _TILE_N) * _TILE_N
    num_tiles = n_pad // _TILE_N

    # Lane-dense layout, only the 4 coordinate rows (16 B/box of DMA).
    bb_t = jnp.zeros((4, n_pad), dtype=jnp.float32)
    bb_t = bb_t.at[:, :n].set(bboxes[:, :4].astype(jnp.float32).T)

    def kernel(bb_ref, stats_ref, acc_ref):
        i = pl.program_id(0)

        @pl.when(i == 0)
        def _():
            acc_ref[0:1, :] = jnp.full((1, _TILE_N), jnp.inf, jnp.float32)
            acc_ref[1:2, :] = jnp.zeros((1, _TILE_N), jnp.float32)
            acc_ref[2:3, :] = jnp.full((1, _TILE_N), -jnp.inf, jnp.float32)

        b = bb_ref[...]                              # (4, TILE_N) f32
        dx = b[2:3, :] - b[0:1, :]
        dy = b[3:4, :] - b[1:2, :]
        sizes = jnp.sqrt(dx * dx + dy * dy) * jnp.float32(1.0 / 15.0)

        lane = lax.broadcasted_iota(jnp.int32, (1, _TILE_N), 1)
        valid = (lane + i * _TILE_N) < n             # n is static (closure)

        # Element-wise lane accumulators; no cross-lane work per step.
        acc_ref[0:1, :] = jnp.minimum(acc_ref[0:1, :],
                                      jnp.where(valid, sizes, jnp.inf))
        acc_ref[1:2, :] = acc_ref[1:2, :] + jnp.where(valid, sizes, 0.0)
        acc_ref[2:3, :] = jnp.maximum(acc_ref[2:3, :],
                                      jnp.where(valid, sizes, -jnp.inf))

        # Single cross-lane XLU reduction + one lane-dense store at the end.
        @pl.when(i == pl.num_programs(0) - 1)
        def _():
            mn = jnp.min(acc_ref[0:1, :], keepdims=True)       # (1, 1)
            mx = jnp.max(acc_ref[2:3, :], keepdims=True)
            mean = jnp.sum(acc_ref[1:2, :], keepdims=True) * jnp.float32(1.0 / n)

            out_lane = lax.broadcasted_iota(jnp.int32, (1, _LANES), 1)
            mn_b = jnp.broadcast_to(mn, (1, _LANES))
            mx_b = jnp.broadcast_to(mx, (1, _LANES))
            mean_b = jnp.broadcast_to(mean, (1, _LANES))
            stats_ref[...] = jnp.where(out_lane == 0, mn_b,
                                       jnp.where(out_lane == 2, mx_b, mean_b))

    return pl.pallas_call(
        kernel,
        out_shape=jax.ShapeDtypeStruct((1, _LANES), jnp.float32),
        grid=(num_tiles,),
        in_specs=[pl.BlockSpec((4, _TILE_N), lambda i: (0, i))],
        out_specs=pl.BlockSpec((1, _LANES), lambda i: (0, 0)),
        scratch_shapes=[pltpu.VMEM((3, _TILE_N), jnp.float32)],
        compiler_params=pltpu.CompilerParams(
            dimension_semantics=("arbitrary",)),
    )(bb_t)


_sizes_tiled = jax.jit(_sizes_tiled)


# ----------------------------------------------------------------------------
# Host wrapper
# ----------------------------------------------------------------------------
def processor_forward_and_sizes(img, bboxes: jax.Array):
    """Processor.forward + Processor.get_sizes.

    Returns:
      const : Python int 1 -- the literal that forward() returns (compile-time
              constant; never produced by the kernel, per perf review).
      stats : (1, 3) float32 -- [min, mean, max] of per-box diagonal sizes.

    `img` mirrors forward(img)'s signature; its pixels are never read, so it
    never enters the kernel (zero DMA traffic).
    """
    del img  # forward() ignores the image entirely
    n = int(bboxes.shape[0])
    if n == 0:
        # Reference get_sizes() would raise on min([]) for an empty tensor.
        raise ValueError("get_sizes: empty bbox tensor")

    if n <= _SMALL_N_MAX:
        stats = _sizes_small(bboxes)
    else:
        stats = _sizes_tiled(bboxes)
    return 1, stats[:, :3]


# ----------------------------------------------------------------------------
# Demo / self-test
# ----------------------------------------------------------------------------
def _ref_stats(bboxes) -> np.ndarray:
    bb = np.asarray(bboxes, dtype=np.float64)
    s = np.sqrt(((bb[:, 2] - bb[:, 0]) / 15.0) ** 2
                + ((bb[:, 3] - bb[:, 1]) / 15.0) ** 2)
    return np.array([[s.min(), s.mean(), s.max()]], dtype=np.float64)


def _make_boxes(key, n_box):
    k_xy, k_wh, k_conf = jax.random.split(key, 3)
    xy = jax.random.uniform(k_xy, (n_box, 2), minval=0.0, maxval=100.0)
    wh = jax.random.uniform(k_wh, (n_box, 2), minval=5.0, maxval=50.0)
    conf = jax.random.uniform(k_conf, (n_box, 1), minval=0.0, maxval=1.0)
    return jnp.concatenate([xy, xy + wh, conf], axis=1).astype(jnp.float32)


if __name__ == "__main__":
    key = jax.random.PRNGKey(0)
    k_img, k_small, k_large = jax.random.split(key, 3)

    # Synthetic NCHW "image" (forward ignores its contents entirely).
    img = jax.random.normal(k_img, (2, 3, 16, 16), dtype=jnp.float32)

    # --- small-N path: native layout, single block, no repack -------------
    bboxes_s = _make_boxes(k_small, 8)
    const, stats_s = processor_forward_and_sizes(img, bboxes_s)
    stats_s = jax.block_until_ready(stats_s)
    assert const == 1, f"forward returned {const}, expected 1"
    np.testing.assert_allclose(np.asarray(stats_s), _ref_stats(bboxes_s),
                               rtol=1e-5, atol=1e-5)

    # --- large-N path: lane-dense tiled grid with lane-wise accumulators --
    bboxes_l = _make_boxes(k_large, 20000)
    const, stats_l = processor_forward_and_sizes(img, bboxes_l)
    stats_l = jax.block_until_ready(stats_l)
    assert const == 1, f"forward returned {const}, expected 1"
    np.testing.assert_allclose(np.asarray(stats_l), _ref_stats(bboxes_l),
                               rtol=1e-4, atol=1e-4)

    print("KERNEL_OK")
</pallas_src>

<mosaic_0001>
module attributes {stable_mosaic.version = 11 : i64} {
  func.func @kernel(%arg0: i32, %arg1: memref<8x5xf32, #tpu.memory_space<vmem>>, %arg2: memref<1x128xf32, #tpu.memory_space<vmem>>) attributes {dimension_semantics = [#tpu.dimension_semantics<arbitrary>], iteration_bounds = array<i64: 1>, scalar_prefetch = 0 : i64, scratch_operands = 0 : i64, tpu.core_type = #tpu.core_type<tc>, window_params = [{pipeline_mode = #tpu.pipeline_mode<synchronous>, transform_indices = @transform_0, window_bounds = array<i64: 8, 5>}, {pipeline_mode = #tpu.pipeline_mode<synchronous>, transform_indices = @transform_1, window_bounds = array<i64: 1, 128>}]} {
    %c0 = arith.constant 0 : index
    %c0_0 = arith.constant 0 : index
    %0 = vector.load %arg1[%c0, %c0_0] : memref<8x5xf32, #tpu.memory_space<vmem>>, vector<8x5xf32>
    %1 = vector.extract_strided_slice %0 {offsets = [0, 2], sizes = [8, 1], strides = [1, 1]} : vector<8x5xf32> to vector<8x1xf32>
    %2 = vector.extract_strided_slice %0 {offsets = [0, 0], sizes = [8, 1], strides = [1, 1]} : vector<8x5xf32> to vector<8x1xf32>
    %3 = arith.subf %1, %2 : vector<8x1xf32>
    %4 = vector.extract_strided_slice %0 {offsets = [0, 3], sizes = [8, 1], strides = [1, 1]} : vector<8x5xf32> to vector<8x1xf32>
    %5 = vector.extract_strided_slice %0 {offsets = [0, 1], sizes = [8, 1], strides = [1, 1]} : vector<8x5xf32> to vector<8x1xf32>
    %6 = arith.subf %4, %5 : vector<8x1xf32>
    %7 = arith.mulf %3, %3 : vector<8x1xf32>
    %8 = arith.mulf %6, %6 : vector<8x1xf32>
    %9 = arith.addf %7, %8 : vector<8x1xf32>
    %10 = math.sqrt %9 : vector<8x1xf32>
    %cst = arith.constant 0.0666666701 : f32
    %11 = vector.broadcast %cst : f32 to vector<8x1xf32>
    %12 = arith.mulf %10, %11 : vector<8x1xf32>
    %13 = vector.shape_cast %12 : vector<8x1xf32> to vector<1x8x1xf32>
    %cst_1 = arith.constant dense<0x7F800000> : vector<1xf32>
    %14 = vector.multi_reduction <minimumf>, %13, %cst_1 [1, 2] : vector<1x8x1xf32> to vector<1xf32>
    %15 = vector.shape_cast %14 : vector<1xf32> to vector<1x1x1xf32>
    %16 = vector.extract %15[0, 0, 0] : f32 from vector<1x1x1xf32>
    %17 = vector.broadcast %16 : f32 to vector<1x1xf32>
    %18 = vector.shape_cast %12 : vector<8x1xf32> to vector<1x8x1xf32>
    %cst_2 = arith.constant dense<0xFF800000> : vector<1xf32>
    %19 = vector.multi_reduction <maximumf>, %18, %cst_2 [1, 2] : vector<1x8x1xf32> to vector<1xf32>
    %20 = vector.shape_cast %19 : vector<1xf32> to vector<1x1x1xf32>
    %21 = vector.extract %20[0, 0, 0] : f32 from vector<1x1x1xf32>
    %22 = vector.broadcast %21 : f32 to vector<1x1xf32>
    %23 = vector.shape_cast %12 : vector<8x1xf32> to vector<1x8x1xf32>
    %cst_3 = arith.constant dense<0.000000e+00> : vector<1xf32>
    %24 = vector.multi_reduction <add>, %23, %cst_3 [1, 2] : vector<1x8x1xf32> to vector<1xf32>
    %25 = vector.shape_cast %24 : vector<1xf32> to vector<1x1x1xf32>
    %26 = vector.extract %25[0, 0, 0] : f32 from vector<1x1x1xf32>
    %27 = vector.broadcast %26 : f32 to vector<1x1xf32>
    %cst_4 = arith.constant 1.250000e-01 : f32
    %28 = vector.broadcast %cst_4 : f32 to vector<1x1xf32>
    %29 = arith.mulf %27, %28 : vector<1x1xf32>
    %30 = tpu.iota {dimensions = array<i32: 1>} : vector<1x128xi32>
    %31 = vector.shape_cast %17 : vector<1x1xf32> to vector<1x1xf32>
    %32 = vector.broadcast %31 : vector<1x1xf32> to vector<1x128xf32>
    %33 = vector.shape_cast %22 : vector<1x1xf32> to vector<1x1xf32>
    %34 = vector.broadcast %33 : vector<1x1xf32> to vector<1x128xf32>
    %35 = vector.shape_cast %29 : vector<1x1xf32> to vector<1x1xf32>
    %36 = vector.broadcast %35 : vector<1x1xf32> to vector<1x128xf32>
    %c0_i32 = arith.constant 0 : i32
    %37 = vector.broadcast %c0_i32 : i32 to vector<1x128xi32>
    %38 = arith.cmpi eq, %30, %37 : vector<1x128xi32>
    %c2_i32 = arith.constant 2 : i32
    %39 = vector.broadcast %c2_i32 : i32 to vector<1x128xi32>
    %40 = arith.cmpi eq, %30, %39 : vector<1x128xi32>
    %41 = arith.select %40, %34, %36 : vector<1x128xi1>, vector<1x128xf32>
    %42 = arith.select %38, %32, %41 : vector<1x128xi1>, vector<1x128xf32>
    %c0_5 = arith.constant 0 : index
    %c0_6 = arith.constant 0 : index
    %43 = vector.load %arg2[%c0_5, %c0_6] : memref<1x128xf32, #tpu.memory_space<vmem>>, vector<1x128xf32>
    tpu.vector_store %arg2[%c0_5, %c0_6], %42 {strides = array<i32>} : memref<1x128xf32, #tpu.memory_space<vmem>>, vector<1x128xf32>,
    return
  }
  func.func @transform_0(%arg0: i32) -> (i32, i32) {
    %c0_i32 = arith.constant 0 : i32
    %c0_i32_0 = arith.constant 0 : i32
    %c0_i32_1 = arith.constant 0 : i32
    return %c0_i32, %c0_i32_0 : i32, i32
  }
  func.func @transform_1(%arg0: i32) -> (i32, i32) {
    %c0_i32 = arith.constant 0 : i32
    %c0_i32_0 = arith.constant 0 : i32
    %c0_i32_1 = arith.constant 0 : i32
    return %c0_i32, %c0_i32_0 : i32, i32
  }
}

</mosaic_0001>

<llo_original>
// kernel: _sizes_small.1
$region0: #{_sizes_small.1}
  #allocation0 [shape = 'u32[]', space=smem, size = 0x4, offset = 0x4, fixed_abs, tag = 'smem constant byte address 0x4 - core index']
  #allocation1 [shape = 'u32[144,128]{1,0:T(1,128)}', space=vmem, size = 0x12000, scoped, tag = 'internal scratch']
  %s0 = inlined_call_operand.hbm [shape: f32[8,5], index: 0, kind: input, shape index: {}]
  %s1 = inlined_call_operand.hbm [shape: f32[1,128], index: 1, kind: output, shape index: {}]
  %s2 = sld [smem:[#allocation0]]
  $region18: #{_sizes_small.1} parent=0
    _
  %s4 = ssub.s32 1, %s2
  %s5 = scalar_select 0, %s4, %s2
  $region1: #{_sizes_small.1} parent=0
    #allocation2 [shape = 'u8[4096]{0}', space=vmem, size = 0x1000, scoped, tag = 'input window, operand 0, single buffered']
    #allocation3 [shape = 's32[1]{0}', space=sflag, size = 0x4, scoped, tag = 'scoped memory for _sizes_small.1']
    #allocation4 [shape = 's32[1]{0}', space=sflag, size = 0x4, scoped, tag = 'scoped memory for _sizes_small.1']
    #allocation5 [shape = 'u8[512]{0}', space=vmem, size = 0x400, scoped, tag = 'output window, operand 0, single buffered']
    %6 = vsyncpa [#allocation3], 0
    %7 = vsyncpa [#allocation4], 0
    // Predicated region
    $region2: #{_sizes_small.1} parent=1 // pred_check
      _
    $region3: #{_sizes_small.1} parent=1 // pred_check_branch
      %9 = sbr.rel (0) target = $region5
    $region4: #{_sizes_small.1} parent=1 // pred_region
      %s11 = ssub.s32 128, 128
      %12 = vsyncadd [#allocation3], %s11
      %s14 = sshll.u32 [#allocation2], 4
      %s15 = int_to_ptr.vmem [resolvable:$true] %s14
      %17 = dma.hbm_to_vmem [thread:$0]  %s0, 128, %s15, [#allocation3]
    $region5: #{_sizes_small.1} parent=1 // pred_fallthru
      _
    // Predicated region
    $region6: #{_sizes_small.1} parent=1 // pred_check
      _
    $region7: #{_sizes_small.1} parent=1 // pred_check_branch
      %19 = sbr.rel (0) target = $region9
    $region8: #{_sizes_small.1} parent=1 // pred_region
      %20 = dma.done [#allocation3], 128
    $region9: #{_sizes_small.1} parent=1 // pred_fallthru
      _
    %v21 = vld [vmem:[#allocation2] sm:$0xff]
    %23 = vrot.lane.b32.xlu0 %v21, 2
    %v24 = vpop.permute.xlu0 %23
    %v26 = vsub.f32 %v21, %v24
    %v27 = vmul.f32 %v26, %v26
    %29 = vrot.lane.b32.xlu0 %v27, 127
    %v30 = vpop.permute.xlu0 %29
    %v32 = vadd.f32 %v27, %v30
    %v33 = vrsqrt.pop %v32
    %v34 = vmul.f32 %v32, %v33
    %vm35 = vcmp.eq.f32.partialorder %v32, inf
    %v36 = vsel %vm35, %v32, %v34
    %vm37 = vcmp.eq.f32.partialorder %v32, 0.0
    %v38 = vand.u32 %v32, 2147483648
    %v39 = vsel %vm37, %v38, %v36
    %v40 = vmul.f32 %v39, 0.06666667
    %vm41 = vcmask 23568
    %v42 = vsel %vm41, %v40, inf
    %43 = vmin.xlane.f32.xlu0 %v42
    %v44 = vpop.xlane.xlu0 %43
    %v45 = vrot.slane %v44, 4
    %v46 = vmin.f32 %v44, %v45
    %v47 = vrot.slane %v46, 2
    %v48 = vmin.f32 %v46, %v47
    %v49 = vrot.slane %v48, 1
    %v50 = vmin.f32 %v48, %v49
    %s51 = vtos %v50
    %v52 = vsel %vm41, %v40, -inf
    %53 = vmax.xlane.f32.xlu0 %v52
    %v54 = vpop.xlane.xlu0 %53
    %v55 = vrot.slane %v54, 4
    %v56 = vmax.f32 %v54, %v55
    %v57 = vrot.slane %v56, 2
    %v58 = vmax.f32 %v56, %v57
    %v59 = vrot.slane %v58, 1
    %v60 = vmax.f32 %v58, %v59
    %s61 = vtos %v60
    %63 = vrot.lane.b32.xlu0 %v40, 126
    %v64 = vpop.permute.xlu0 %63
    %vm66 = vcmask 7168
    %v67 = vsel %vm66, %v64, 0.0
    %68 = vadd.xlane.f32.xlu0 %v67
    %v69 = vpop.xlane.xlu0 %68
    %v70 = vrot.slane %v69, 4
    %v71 = vadd.f32 %v69, %v70
    %v72 = vrot.slane %v71, 2
    %v73 = vadd.f32 %v71, %v72
    %v74 = vrot.slane %v73, 1
    %v75 = vadd.f32 %v73, %v74
    %s76 = vtos %v75
    %v77 = vstv %s76
    %v78 = vmul.f32 %v77, 0.125
    %v79 = vlaneseq
    %v80 = vand.u32 %v79, 127
    %v81 = vstv %s51
    %v82 = vstv %s61
    %vm83 = vcmp.eq.s32.totalorder %v80, 0
    %vm84 = vcmp.eq.s32.totalorder %v80, 2
    %v85 = vsel %vm84, %v82, %v78
    %v86 = vsel %vm83, %v81, %v85
    %87 = vst [vmem:[#allocation5] sm:$0x1] %v86
    // Predicated region
    $region10: #{_sizes_small.1} parent=1 // pred_check
      _
    $region11: #{_sizes_small.1} parent=1 // pred_check_branch
      %89 = sbr.rel (0) target = $region13
    $region12: #{_sizes_small.1} parent=1 // pred_region
      %s91 = ssub.s32 16, 16
      %92 = vsyncadd [#allocation4], %s91
      %s94 = sshll.u32 [#allocation5], 4
      %s95 = int_to_ptr.vmem [resolvable:$true] %s94
      %97 = dma.vmem_to_hbm [thread:$0]  %s95, 16, %s1, [#allocation4]
    $region13: #{_sizes_small.1} parent=1 // pred_fallthru
      _
    // Predicated region
    $region14: #{_sizes_small.1} parent=1 // pred_check
      _
    $region15: #{_sizes_small.1} parent=1 // pred_check_branch
      %99 = sbr.rel (0) target = $region17
    $region16: #{_sizes_small.1} parent=1 // pred_region
      %100 = dma.done [#allocation4], 16
    $region17: #{_sizes_small.1} parent=1 // pred_fallthru
      _
    %101 = vsyncpa [#allocation3], 1
    %102 = vsyncpa [#allocation4], 1

</llo_original>
